<compile_context>
chip_gen: v7x
topology: tpu7x:2x2x1
jax: 0.10.0
libtpu: 0.0.40
codegen_flags: <defaults>
</compile_context>

<pallas_src>
import jax
import jax.numpy as jnp
from jax.experimental import pallas as pl
from jax.experimental.pallas import tpu as pltpu

_LANES = 128
_SUBLANES = 8


def _simple_kernel(p_ref, x_ref, z_ref, y1_ref, y2_ref, s_ref):
    # p_ref: (7,) f32 scalars in SMEM (scalar-prefetched) -> [p0 .. p6]
    # x_ref / z_ref / outputs: (blk, 128) lane-dense f32 tiles in VMEM.
    x = x_ref[...]
    z = z_ref[...]

    p0 = p_ref[0]
    p1 = p_ref[1]
    p2 = p_ref[2]
    p3 = p_ref[3]
    p4 = p_ref[4]
    p5 = p_ref[5]
    p6 = p_ref[6]

    def sigmoid(v):
        # tanh-based sigmoid: one EUP op per element, no exp / no exact divide.
        # Keeps the kernel DMA-bound on every chip generation and agrees with
        # jax.nn.sigmoid to ~1 ULP (well inside the 1e-6 tolerance).
        return 0.5 * jnp.tanh(0.5 * v) + 0.5

    y1_ref[...] = sigmoid(x * p0 + p1)
    y2_ref[...] = sigmoid(x * p2 + z * p3 + p4)
    s_ref[...] = sigmoid(x - p5) * sigmoid(p6 - x)


def simple_forward(params, x, z, *, block_rows=2048, min_steps=4):
    """params: (7,) f32; x, z: (N, 1) (or (N,)) -> (y1, y2, s), each (N, 2) f32."""
    n = x.shape[0]
    xf = jnp.asarray(x, jnp.float32).reshape(-1)
    zf = jnp.asarray(z, jnp.float32).reshape(-1)
    params = jnp.asarray(params, jnp.float32).reshape(-1)

    # Lane-dense layout: (rows, 128).  Pad only the sub-128 tail (if any); when
    # N is a multiple of 128 the reshape is a free bitcast, no extra HBM pass.
    rows = pl.cdiv(n, _LANES)
    tail = rows * _LANES - n
    if tail:
        xf = jnp.pad(xf, (0, tail))
        zf = jnp.pad(zf, (0, tail))
    x2 = xf.reshape(rows, _LANES)
    z2 = zf.reshape(rows, _LANES)

    # Row-tile size: caller cap rounded down to a sublane multiple, then capped
    # so the grid has at least `min_steps` steps (both v7x TCs get work).  The
    # last block may overhang `rows`; Pallas masks it.
    blk = max(_SUBLANES, (block_rows // _SUBLANES) * _SUBLANES)
    cap = -(-rows // min_steps)                                   # ceil(rows / min_steps)
    cap = ((cap + _SUBLANES - 1) // _SUBLANES) * _SUBLANES        # round up to 8
    blk = min(blk, cap)
    if blk >= rows:
        blk = rows  # single-step grid; full-extent block is always legal
    grid = (pl.cdiv(rows, blk),)

    # index_map receives (grid_i, prefetch_ref); the prefetch ref is unused.
    tile = pl.BlockSpec((blk, _LANES), lambda i, p: (i, 0))
    out_shape = tuple(
        jax.ShapeDtypeStruct((rows, _LANES), jnp.float32) for _ in range(3)
    )

    y1p, y2p, sp = pl.pallas_call(
        _simple_kernel,
        out_shape=out_shape,
        grid_spec=pltpu.PrefetchScalarGridSpec(
            num_scalar_prefetch=1,          # params -> SMEM, off the hot path
            grid=grid,
            in_specs=[tile, tile],          # x, z
            out_specs=[tile, tile, tile],   # y1, y2, s (lane-dense slabs)
        ),
        compiler_params=pltpu.CompilerParams(
            dimension_semantics=("parallel",),   # shard row-tiles across v7x TCs
        ),
    )(params, x2, z2)

    def two_col(y):
        # (rows*128,) slab -> (N, 2) = concat((1 - y, y), dim=1).  Done outside
        # the kernel (a last-dim-2 kernel output would force masked stores);
        # under jit the three slice+stack ops fuse into one pass.
        y = y.reshape(-1)[:n]
        return jnp.stack([1.0 - y, y], axis=1)

    return two_col(y1p), two_col(y2p), two_col(sp)


def simple_reference(params, x, z):
    p = [params[i] for i in range(7)]
    sig = jax.nn.sigmoid
    y1 = sig(x * p[0] + p[1])
    y2 = sig(x * p[2] + z * p[3] + p[4])
    s = sig(x - p[5]) * sig(p[6] - x)
    cat = lambda y: jnp.concatenate([1.0 - y, y], axis=1)
    return cat(y1), cat(y2), cat(s)


if __name__ == "__main__":
    fwd = jax.jit(simple_forward, static_argnames=("block_rows", "min_steps"))

    # Deterministic parameter init matching the module's __init__ (all zeros):
    # five (1, 1) params + two (1,) params -> flattened to a (7,) scalar vector.
    params = jnp.zeros((7,), dtype=jnp.float32)

    key = jax.random.PRNGKey(0)
    kx, kz, kp = jax.random.split(key, 3)
    N = 8
    x = jax.random.normal(kx, (N, 1), dtype=jnp.float32)
    z = jax.random.normal(kz, (N, 1), dtype=jnp.float32)

    y1, y2, s = fwd(params, x, z)
    jax.block_until_ready((y1, y2, s))

    r1, r2, rs = simple_reference(params, x, z)
    assert y1.shape == (N, 2) and y2.shape == (N, 2) and s.shape == (N, 2)
    assert jnp.allclose(y1, r1, atol=1e-6)
    assert jnp.allclose(y2, r2, atol=1e-6)
    assert jnp.allclose(s, rs, atol=1e-6)

    # Second check: nonzero params + a size that exercises the sub-128 tail pad
    # and a multi-step grid (rows=24, blk=8 -> 3 grid steps).
    params2 = jax.random.normal(kp, (7,), dtype=jnp.float32)
    kx2, kz2 = jax.random.split(kp)
    N2 = 3000
    x2 = jax.random.normal(kx2, (N2, 1), dtype=jnp.float32)
    z2 = jax.random.normal(kz2, (N2, 1), dtype=jnp.float32)
    y1b, y2b, sb = fwd(params2, x2, z2, block_rows=8)
    jax.block_until_ready((y1b, y2b, sb))
    r1b, r2b, rsb = simple_reference(params2, x2, z2)
    assert jnp.allclose(y1b, r1b, atol=1e-6)
    assert jnp.allclose(y2b, r2b, atol=1e-6)
    assert jnp.allclose(sb, rsb, atol=1e-6)

    # Third check: N an exact multiple of 128 (no padding path at all) with a
    # default block size that still yields a multi-step grid for v7x.
    N3 = 4096
    kx3, kz3 = jax.random.split(kz2)
    x3 = jax.random.normal(kx3, (N3, 1), dtype=jnp.float32)
    z3 = jax.random.normal(kz3, (N3, 1), dtype=jnp.float32)
    y1c, y2c, sc = fwd(params2, x3, z3)
    jax.block_until_ready((y1c, y2c, sc))
    r1c, r2c, rsc = simple_reference(params2, x3, z3)
    assert jnp.allclose(y1c, r1c, atol=1e-6)
    assert jnp.allclose(y2c, r2c, atol=1e-6)
    assert jnp.allclose(sc, rsc, atol=1e-6)

    print("KERNEL_OK")
</pallas_src>

<mosaic_0001>
module attributes {stable_mosaic.version = 11 : i64} {
  func.func @_simple_kernel(%arg0: i32, %arg1: memref<7xf32, #tpu.memory_space<smem>>, %arg2: memref<1x128xf32, #tpu.memory_space<vmem>>, %arg3: memref<1x128xf32, #tpu.memory_space<vmem>>, %arg4: memref<1x128xf32, #tpu.memory_space<vmem>>, %arg5: memref<1x128xf32, #tpu.memory_space<vmem>>, %arg6: memref<1x128xf32, #tpu.memory_space<vmem>>) attributes {dimension_semantics = [#tpu.dimension_semantics<parallel>], iteration_bounds = array<i64: 1>, scalar_prefetch = 1 : i64, scratch_operands = 0 : i64, tpu.core_type = #tpu.core_type<tc>, window_params = [{transform_indices = @transform_0, window_bounds = array<i64: 1, 128>}, {transform_indices = @transform_1, window_bounds = array<i64: 1, 128>}, {transform_indices = @transform_2, window_bounds = array<i64: 1, 128>}, {transform_indices = @transform_3, window_bounds = array<i64: 1, 128>}, {transform_indices = @transform_4, window_bounds = array<i64: 1, 128>}]} {
    %c0 = arith.constant 0 : index
    %c0_0 = arith.constant 0 : index
    %0 = vector.load %arg2[%c0, %c0_0] : memref<1x128xf32, #tpu.memory_space<vmem>>, vector<1x128xf32>
    %c0_1 = arith.constant 0 : index
    %c0_2 = arith.constant 0 : index
    %1 = vector.load %arg3[%c0_1, %c0_2] : memref<1x128xf32, #tpu.memory_space<vmem>>, vector<1x128xf32>
    %c0_3 = arith.constant 0 : index
    %2 = memref.load %arg1[%c0_3] : memref<7xf32, #tpu.memory_space<smem>>
    %c1 = arith.constant 1 : index
    %3 = memref.load %arg1[%c1] : memref<7xf32, #tpu.memory_space<smem>>
    %c2 = arith.constant 2 : index
    %4 = memref.load %arg1[%c2] : memref<7xf32, #tpu.memory_space<smem>>
    %c3 = arith.constant 3 : index
    %5 = memref.load %arg1[%c3] : memref<7xf32, #tpu.memory_space<smem>>
    %c4 = arith.constant 4 : index
    %6 = memref.load %arg1[%c4] : memref<7xf32, #tpu.memory_space<smem>>
    %c5 = arith.constant 5 : index
    %7 = memref.load %arg1[%c5] : memref<7xf32, #tpu.memory_space<smem>>
    %c6 = arith.constant 6 : index
    %8 = memref.load %arg1[%c6] : memref<7xf32, #tpu.memory_space<smem>>
    %9 = vector.broadcast %2 : f32 to vector<1x128xf32>
    %10 = arith.mulf %0, %9 : vector<1x128xf32>
    %11 = vector.broadcast %3 : f32 to vector<1x128xf32>
    %12 = arith.addf %10, %11 : vector<1x128xf32>
    %cst = arith.constant 5.000000e-01 : f32
    %13 = vector.broadcast %cst : f32 to vector<1x128xf32>
    %14 = arith.mulf %13, %12 : vector<1x128xf32>
    %15 = math.tanh %14 : vector<1x128xf32>
    %cst_4 = arith.constant 5.000000e-01 : f32
    %16 = vector.broadcast %cst_4 : f32 to vector<1x128xf32>
    %17 = arith.mulf %16, %15 : vector<1x128xf32>
    %cst_5 = arith.constant 5.000000e-01 : f32
    %18 = vector.broadcast %cst_5 : f32 to vector<1x128xf32>
    %19 = arith.addf %17, %18 : vector<1x128xf32>
    %c0_6 = arith.constant 0 : index
    %c0_7 = arith.constant 0 : index
    %20 = vector.load %arg4[%c0_6, %c0_7] : memref<1x128xf32, #tpu.memory_space<vmem>>, vector<1x128xf32>
    tpu.vector_store %arg4[%c0_6, %c0_7], %19 {strides = array<i32>} : memref<1x128xf32, #tpu.memory_space<vmem>>, vector<1x128xf32>,
    %21 = vector.broadcast %4 : f32 to vector<1x128xf32>
    %22 = arith.mulf %0, %21 : vector<1x128xf32>
    %23 = vector.broadcast %5 : f32 to vector<1x128xf32>
    %24 = arith.mulf %1, %23 : vector<1x128xf32>
    %25 = arith.addf %22, %24 : vector<1x128xf32>
    %26 = vector.broadcast %6 : f32 to vector<1x128xf32>
    %27 = arith.addf %25, %26 : vector<1x128xf32>
    %cst_8 = arith.constant 5.000000e-01 : f32
    %28 = vector.broadcast %cst_8 : f32 to vector<1x128xf32>
    %29 = arith.mulf %28, %27 : vector<1x128xf32>
    %30 = math.tanh %29 : vector<1x128xf32>
    %cst_9 = arith.constant 5.000000e-01 : f32
    %31 = vector.broadcast %cst_9 : f32 to vector<1x128xf32>
    %32 = arith.mulf %31, %30 : vector<1x128xf32>
    %cst_10 = arith.constant 5.000000e-01 : f32
    %33 = vector.broadcast %cst_10 : f32 to vector<1x128xf32>
    %34 = arith.addf %32, %33 : vector<1x128xf32>
    %c0_11 = arith.constant 0 : index
    %c0_12 = arith.constant 0 : index
    %35 = vector.load %arg5[%c0_11, %c0_12] : memref<1x128xf32, #tpu.memory_space<vmem>>, vector<1x128xf32>
    tpu.vector_store %arg5[%c0_11, %c0_12], %34 {strides = array<i32>} : memref<1x128xf32, #tpu.memory_space<vmem>>, vector<1x128xf32>,
    %36 = vector.broadcast %7 : f32 to vector<1x128xf32>
    %37 = arith.subf %0, %36 : vector<1x128xf32>
    %cst_13 = arith.constant 5.000000e-01 : f32
    %38 = vector.broadcast %cst_13 : f32 to vector<1x128xf32>
    %39 = arith.mulf %38, %37 : vector<1x128xf32>
    %40 = math.tanh %39 : vector<1x128xf32>
    %cst_14 = arith.constant 5.000000e-01 : f32
    %41 = vector.broadcast %cst_14 : f32 to vector<1x128xf32>
    %42 = arith.mulf %41, %40 : vector<1x128xf32>
    %cst_15 = arith.constant 5.000000e-01 : f32
    %43 = vector.broadcast %cst_15 : f32 to vector<1x128xf32>
    %44 = arith.addf %42, %43 : vector<1x128xf32>
    %45 = vector.broadcast %8 : f32 to vector<1x128xf32>
    %46 = arith.subf %45, %0 : vector<1x128xf32>
    %cst_16 = arith.constant 5.000000e-01 : f32
    %47 = vector.broadcast %cst_16 : f32 to vector<1x128xf32>
    %48 = arith.mulf %47, %46 : vector<1x128xf32>
    %49 = math.tanh %48 : vector<1x128xf32>
    %cst_17 = arith.constant 5.000000e-01 : f32
    %50 = vector.broadcast %cst_17 : f32 to vector<1x128xf32>
    %51 = arith.mulf %50, %49 : vector<1x128xf32>
    %cst_18 = arith.constant 5.000000e-01 : f32
    %52 = vector.broadcast %cst_18 : f32 to vector<1x128xf32>
    %53 = arith.addf %51, %52 : vector<1x128xf32>
    %54 = arith.mulf %44, %53 : vector<1x128xf32>
    %c0_19 = arith.constant 0 : index
    %c0_20 = arith.constant 0 : index
    %55 = vector.load %arg6[%c0_19, %c0_20] : memref<1x128xf32, #tpu.memory_space<vmem>>, vector<1x128xf32>
    tpu.vector_store %arg6[%c0_19, %c0_20], %54 {strides = array<i32>} : memref<1x128xf32, #tpu.memory_space<vmem>>, vector<1x128xf32>,
    return
  }
  func.func @transform_0(%arg0: i32, %arg1: memref<7xf32, #tpu.memory_space<smem>>) -> (i32, i32) {
    %c0_i32 = arith.constant 0 : i32
    %c0_i32_0 = arith.constant 0 : i32
    return %arg0, %c0_i32 : i32, i32
  }
  func.func @transform_1(%arg0: i32, %arg1: memref<7xf32, #tpu.memory_space<smem>>) -> (i32, i32) {
    %c0_i32 = arith.constant 0 : i32
    %c0_i32_0 = arith.constant 0 : i32
    return %arg0, %c0_i32 : i32, i32
  }
  func.func @transform_2(%arg0: i32, %arg1: memref<7xf32, #tpu.memory_space<smem>>) -> (i32, i32) {
    %c0_i32 = arith.constant 0 : i32
    %c0_i32_0 = arith.constant 0 : i32
    return %arg0, %c0_i32 : i32, i32
  }
  func.func @transform_3(%arg0: i32, %arg1: memref<7xf32, #tpu.memory_space<smem>>) -> (i32, i32) {
    %c0_i32 = arith.constant 0 : i32
    %c0_i32_0 = arith.constant 0 : i32
    return %arg0, %c0_i32 : i32, i32
  }
  func.func @transform_4(%arg0: i32, %arg1: memref<7xf32, #tpu.memory_space<smem>>) -> (i32, i32) {
    %c0_i32 = arith.constant 0 : i32
    %c0_i32_0 = arith.constant 0 : i32
    return %arg0, %c0_i32 : i32, i32
  }
}

</mosaic_0001>

<llo_original>
// kernel: simple_forward.1
$region0: #{simple_forward.1}
  #allocation0 [shape = 'u32[]', space=smem, size = 0x4, offset = 0x4, fixed_abs, tag = 'smem constant byte address 0x4 - core index']
  #allocation1 [shape = 'u32[144,128]{1,0:T(1,128)}', space=vmem, size = 0x12000, scoped, tag = 'internal scratch']
  #allocation2 [shape = 's32[1]{0}', space=sflag, size = 0x4, scoped, tag = 'scoped memory for simple_forward.1']
  #allocation3 [shape = 'u8[512]{0}', space=smem, size = 0x200, scoped, tag = 'prefetched SMEM operand 0']
  %s0 = inlined_call_operand.vmem [shape: f32[7], index: 0, kind: input, shape index: {}]
  %s1 = inlined_call_operand.vmem [shape: f32[1,128], index: 1, kind: input, shape index: {}]
  %s2 = inlined_call_operand.vmem [shape: f32[1,128], index: 2, kind: input, shape index: {}]
  %s3 = inlined_call_operand.vmem [shape: f32[1,128], index: 3, kind: output, shape index: {0}]
  %s4 = inlined_call_operand.vmem [shape: f32[1,128], index: 4, kind: output, shape index: {1}]
  %s5 = inlined_call_operand.vmem [shape: f32[1,128], index: 5, kind: output, shape index: {2}]
  %6 = xla_tuple %s3, %s4, %s5
  %s7 = sld [smem:[#allocation0]]
  $region34: #{simple_forward.1} parent=0
    _
  %s9 = ssub.s32 1, %s7
  %s10 = scalar_select 0, %s9, %s7
  %s11 = sshll.u32 %s0, 4
  %s12 = int_to_ptr.vmem [resolvable:$true] %s11
  %14 = dma.vmem_to_smem %s12, 16, [#allocation3], [#allocation2]
  %15 = dma.done [#allocation2], 16
  %16 = sfence
  // Predicated region
  $region2: #{simple_forward.1} parent=0 // pred_check
    _
  $region3: #{simple_forward.1} parent=0 // pred_check_branch
    %18 = sbr.rel (0) target = $region5
  $region4: #{simple_forward.1} parent=0 // pred_region
    _
  $region5: #{simple_forward.1} parent=0 // pred_fallthru
    _
  // Predicated region
  $region6: #{simple_forward.1} parent=0 // pred_check
    _
  $region7: #{simple_forward.1} parent=0 // pred_check_branch
    %20 = sbr.rel (0) target = $region9
  $region8: #{simple_forward.1} parent=0 // pred_region
    _
  $region9: #{simple_forward.1} parent=0 // pred_fallthru
    _
  %v21 = vld [vmem:[%s1] sm:$0x1]
  %v22 = vld [vmem:[%s2] sm:$0x1]
  %s23 = sld [smem:[#allocation3]]
  %s24 = sld [smem:[#allocation3 + $0x1]]
  %s25 = sld [smem:[#allocation3 + $0x2]]
  %s26 = sld [smem:[#allocation3 + $0x3]]
  %s27 = sld [smem:[#allocation3 + $0x4]]
  %s28 = sld [smem:[#allocation3 + $0x5]]
  %s29 = sld [smem:[#allocation3 + $0x6]]
  %v30 = vstv %s23
  %v31 = vmul.f32 %v21, %v30
  %v32 = vstv %s24
  %v33 = vadd.f32 %v31, %v32
  %v34 = vmul.f32 %v33, 0.5
  %v35 = vtanh.pop %v34
  %v36 = vmul.f32 %v35, 0.5
  %v37 = vadd.f32 %v36, 0.5
  %38 = vst [vmem:[%s3] sm:$0x1] %v37
  %v39 = vstv %s25
  %v40 = vmul.f32 %v21, %v39
  %v41 = vstv %s26
  %v42 = vmul.f32 %v22, %v41
  %v43 = vadd.f32 %v40, %v42
  %v44 = vstv %s27
  %v45 = vadd.f32 %v43, %v44
  %v46 = vmul.f32 %v45, 0.5
  %v47 = vtanh.pop %v46
  %v48 = vmul.f32 %v47, 0.5
  %v49 = vadd.f32 %v48, 0.5
  %50 = vst [vmem:[%s4] sm:$0x1] %v49
  %v51 = vstv %s28
  %v52 = vsub.f32 %v21, %v51
  %v53 = vmul.f32 %v52, 0.5
  %v54 = vtanh.pop %v53
  %v55 = vmul.f32 %v54, 0.5
  %v56 = vadd.f32 %v55, 0.5
  %v57 = vstv %s29
  %v58 = vsub.f32 %v57, %v21
  %v59 = vmul.f32 %v58, 0.5
  %v60 = vtanh.pop %v59
  %v61 = vmul.f32 %v60, 0.5
  %v62 = vadd.f32 %v61, 0.5
  %v63 = vmul.f32 %v56, %v62
  %64 = vst [vmem:[%s5] sm:$0x1] %v63
  // Predicated region
  $region10: #{simple_forward.1} parent=0 // pred_check
    _
  $region11: #{simple_forward.1} parent=0 // pred_check_branch
    %66 = sbr.rel (0) target = $region13
  $region12: #{simple_forward.1} parent=0 // pred_region
    _
  $region13: #{simple_forward.1} parent=0 // pred_fallthru
    _
  // Predicated region
  $region14: #{simple_forward.1} parent=0 // pred_check
    _
  $region15: #{simple_forward.1} parent=0 // pred_check_branch
    %68 = sbr.rel (0) target = $region17
  $region16: #{simple_forward.1} parent=0 // pred_region
    _
  $region17: #{simple_forward.1} parent=0 // pred_fallthru
    _
  // Predicated region
  $region18: #{simple_forward.1} parent=0 // pred_check
    _
  $region19: #{simple_forward.1} parent=0 // pred_check_branch
    %70 = sbr.rel (0) target = $region21
  $region20: #{simple_forward.1} parent=0 // pred_region
    _
  $region21: #{simple_forward.1} parent=0 // pred_fallthru
    _
  // Predicated region
  $region22: #{simple_forward.1} parent=0 // pred_check
    _
  $region23: #{simple_forward.1} parent=0 // pred_check_branch
    %72 = sbr.rel (0) target = $region25
  $region24: #{simple_forward.1} parent=0 // pred_region
    _
  $region25: #{simple_forward.1} parent=0 // pred_fallthru
    _
  // Predicated region
  $region26: #{simple_forward.1} parent=0 // pred_check
    _
  $region27: #{simple_forward.1} parent=0 // pred_check_branch
    %74 = sbr.rel (0) target = $region29
  $region28: #{simple_forward.1} parent=0 // pred_region
    _
  $region29: #{simple_forward.1} parent=0 // pred_fallthru
    _
  // Predicated region
  $region30: #{simple_forward.1} parent=0 // pred_check
    _
  $region31: #{simple_forward.1} parent=0 // pred_check_branch
    %76 = sbr.rel (0) target = $region33
  $region32: #{simple_forward.1} parent=0 // pred_region
    _
  $region33: #{simple_forward.1} parent=0 // pred_fallthru
    _

</llo_original>
